<compile_context>
chip_gen: v5e
topology: v5e:2x2
jax: 0.10.0
libtpu: 0.0.40
codegen_flags: <defaults>
</compile_context>

<pallas_src>
import functools
import math

import jax
import jax.numpy as jnp
from jax.experimental import pallas as pl
from jax.experimental.pallas import tpu as pltpu

LN_EPS = 1e-5


def _round_up(x, m):
    return (x + m - 1) // m * m


def _landmark_embed_kernel(x_ref, w1_ref, gamma_ref, beta_ref, w2_ref, o_ref,
                           *, hidden_dim):
    # First projection: native-dtype MXU matmul with f32 accumulation.
    h = jnp.dot(x_ref[...], w1_ref[...],
                preferred_element_type=jnp.float32)              # (TM, Hp) f32

    # LayerNorm over the true hidden_dim.  Padded hidden columns of h are
    # exactly zero (w1 zero-padded), so sums over the padded width are sums
    # over the real width; divide by the real hidden_dim.
    inv_n = 1.0 / float(hidden_dim)
    mean = jnp.sum(h, axis=-1, keepdims=True) * inv_n
    mean_sq = jnp.sum(h * h, axis=-1, keepdims=True) * inv_n
    var = mean_sq - mean * mean
    inv = jax.lax.rsqrt(var + LN_EPS)                            # EUP rsqrt

    gamma = gamma_ref[...].astype(jnp.float32)
    beta = beta_ref[...].astype(jnp.float32)
    # (h - mean) * inv * gamma + beta ; gamma/beta zero-padded -> padded cols == 0.
    h = (h - mean) * (inv * gamma) + beta

    # ReLU
    h = jnp.maximum(h, 0.0)

    # Second projection (padded hidden rows of w2 are zero).
    out = jnp.dot(h.astype(w2_ref.dtype), w2_ref[...],
                  preferred_element_type=jnp.float32)            # (TM, Ep)
    o_ref[...] = out.astype(o_ref.dtype)


def landmark_embedding(x, w1, gamma, beta, w2, *, tm=512):
    """x: (..., input_dim) -> (..., embed_dim).

    w1: (input_dim, hidden_dim) == torch Linear(input_dim, hidden_dim).weight.T
    w2: (hidden_dim, embed_dim) == torch Linear(hidden_dim, embed_dim).weight.T
    gamma, beta: (hidden_dim,)  == LayerNorm affine params.
    """
    lead = x.shape[:-1]
    input_dim = x.shape[-1]
    hidden_dim = w1.shape[1]
    embed_dim = w2.shape[1]
    m = math.prod(lead) if lead else 1

    # Lane-dense feature padding (multiples of 128), sublane-safe row padding.
    ip = _round_up(input_dim, 128)
    hp = _round_up(hidden_dim, 128)
    ep = _round_up(embed_dim, 128)
    tm_eff = min(tm, _round_up(m, 16))       # 16-sublane safe for f32 and bf16
    m_pad = _round_up(m, tm_eff)
    grid_m = m_pad // tm_eff

    x2 = jnp.pad(x.reshape(m, input_dim),
                 ((0, m_pad - m), (0, ip - input_dim)))
    w1p = jnp.pad(w1, ((0, ip - input_dim), (0, hp - hidden_dim)))
    w2p = jnp.pad(w2, ((0, hp - hidden_dim), (0, ep - embed_dim)))
    gammap = jnp.pad(gamma.reshape(1, hidden_dim), ((0, 0), (0, hp - hidden_dim)))
    betap = jnp.pad(beta.reshape(1, hidden_dim), ((0, 0), (0, hp - hidden_dim)))

    # VMEM budget: resident weights + double-buffered x/out tiles + f32 h tile.
    xb = jnp.dtype(x.dtype).itemsize
    wb = jnp.dtype(w1.dtype).itemsize
    resident = (ip * hp + hp * ep + 2 * hp) * wb
    per_tile = 2 * tm_eff * (ip + ep) * xb + tm_eff * hp * 4
    vmem_budget = min(48 * 1024 * 1024,
                      max(32 * 1024 * 1024, int(2 * (resident + per_tile))))

    cost = pl.CostEstimate(
        flops=2 * m_pad * (ip * hp + hp * ep),
        transcendentals=m_pad,
        bytes_accessed=(m_pad * ip + m_pad * ep) * xb
        + (ip * hp + hp * ep + 2 * hp) * wb,
    )

    kernel = functools.partial(_landmark_embed_kernel, hidden_dim=hidden_dim)

    out = pl.pallas_call(
        kernel,
        out_shape=jax.ShapeDtypeStruct((m_pad, ep), x.dtype),
        grid_spec=pltpu.PrefetchScalarGridSpec(
            num_scalar_prefetch=0,
            grid=(grid_m,),
            in_specs=[
                pl.BlockSpec((tm_eff, ip), lambda i: (i, 0)),   # streamed x
                pl.BlockSpec((ip, hp), lambda i: (0, 0)),       # resident w1
                pl.BlockSpec((1, hp), lambda i: (0, 0)),        # resident gamma
                pl.BlockSpec((1, hp), lambda i: (0, 0)),        # resident beta
                pl.BlockSpec((hp, ep), lambda i: (0, 0)),       # resident w2
            ],
            out_specs=pl.BlockSpec((tm_eff, ep), lambda i: (i, 0)),
        ),
        compiler_params=pltpu.CompilerParams(
            dimension_semantics=("parallel",),
            vmem_limit_bytes=vmem_budget,
        ),
        cost_estimate=cost,
    )(x2, w1p, gammap, betap, w2p)

    out = out[:m, :embed_dim]
    return out.reshape(*lead, embed_dim)


def _reference(x, w1, gamma, beta, w2):
    h = x @ w1
    mean = jnp.mean(h, axis=-1, keepdims=True)
    var = jnp.mean((h - mean) ** 2, axis=-1, keepdims=True)
    h = (h - mean) / jnp.sqrt(var + LN_EPS)
    h = h * gamma + beta
    h = jnp.maximum(h, 0.0)
    return h @ w2


if __name__ == "__main__":
    # Small shapes consistent with the module's forward.
    batch, seq = 2, 8
    input_dim, hidden_dim, embed_dim = 16, 32, 24

    key = jax.random.PRNGKey(0)
    kx, k1, k2, kg, kb = jax.random.split(key, 5)

    x = jax.random.normal(kx, (batch, seq, input_dim), dtype=jnp.float32)

    # torch Linear weight is (out, in); we store the transposed (in, out) form.
    w1 = jax.random.normal(k1, (input_dim, hidden_dim), dtype=jnp.float32) * 0.1
    w2 = jax.random.normal(k2, (hidden_dim, embed_dim), dtype=jnp.float32) * 0.1
    # LayerNorm defaults are gamma=1, beta=0; perturb slightly to exercise affine path.
    gamma = jnp.ones((hidden_dim,), dtype=jnp.float32) + 0.01 * jax.random.normal(kg, (hidden_dim,))
    beta = jnp.zeros((hidden_dim,), dtype=jnp.float32) + 0.01 * jax.random.normal(kb, (hidden_dim,))

    out = landmark_embedding(x, w1, gamma, beta, w2)
    out = jax.block_until_ready(out)

    ref = _reference(x, w1, gamma, beta, w2)
    assert out.shape == (batch, seq, embed_dim)
    assert jnp.allclose(out, ref, atol=1e-4, rtol=1e-4), float(jnp.max(jnp.abs(out - ref)))

    print("KERNEL_OK")
</pallas_src>

<mosaic_0001>
module attributes {stable_mosaic.version = 11 : i64} {
  func.func @_landmark_embed_kernel(%arg0: i32, %arg1: memref<16x128xf32, #tpu.memory_space<vmem>>, %arg2: memref<128x128xf32, #tpu.memory_space<vmem>>, %arg3: memref<1x128xf32, #tpu.memory_space<vmem>>, %arg4: memref<1x128xf32, #tpu.memory_space<vmem>>, %arg5: memref<128x128xf32, #tpu.memory_space<vmem>>, %arg6: memref<16x128xf32, #tpu.memory_space<vmem>>) attributes {dimension_semantics = [#tpu.dimension_semantics<parallel>], iteration_bounds = array<i64: 1>, scalar_prefetch = 0 : i64, scratch_operands = 0 : i64, tpu.core_type = #tpu.core_type<tc>, window_params = [{transform_indices = @transform_0, window_bounds = array<i64: 16, 128>}, {pipeline_mode = #tpu.pipeline_mode<synchronous>, transform_indices = @transform_1, window_bounds = array<i64: 128, 128>}, {pipeline_mode = #tpu.pipeline_mode<synchronous>, transform_indices = @transform_2, window_bounds = array<i64: 1, 128>}, {pipeline_mode = #tpu.pipeline_mode<synchronous>, transform_indices = @transform_3, window_bounds = array<i64: 1, 128>}, {pipeline_mode = #tpu.pipeline_mode<synchronous>, transform_indices = @transform_4, window_bounds = array<i64: 128, 128>}, {transform_indices = @transform_5, window_bounds = array<i64: 16, 128>}]} {
    %c0 = arith.constant 0 : index
    %c0_0 = arith.constant 0 : index
    %0 = vector.load %arg1[%c0, %c0_0] : memref<16x128xf32, #tpu.memory_space<vmem>>, vector<16x128xf32>
    %c0_1 = arith.constant 0 : index
    %c0_2 = arith.constant 0 : index
    %1 = vector.load %arg2[%c0_1, %c0_2] : memref<128x128xf32, #tpu.memory_space<vmem>>, vector<128x128xf32>
    %cst = arith.constant dense<0.000000e+00> : vector<16x128xf32>
    %2 = tpu.matmul %0, %1, %cst {dimension_numbers = #tpu.dot_dimension_numbers<[1], [0], [0], [1], [0, 0, 1, 1], [], []>} : vector<16x128xf32>, vector<128x128xf32>, vector<16x128xf32> -> vector<16x128xf32>
    %cst_3 = arith.constant dense<0.000000e+00> : vector<16xf32>
    %3 = vector.multi_reduction <add>, %2, %cst_3 [1] : vector<16x128xf32> to vector<16xf32>
    %4 = vector.shape_cast %3 : vector<16xf32> to vector<16x1xf32>
    %cst_4 = arith.constant 3.125000e-02 : f32
    %5 = vector.broadcast %cst_4 : f32 to vector<16x1xf32>
    %6 = arith.mulf %4, %5 : vector<16x1xf32>
    %7 = arith.mulf %2, %2 : vector<16x128xf32>
    %cst_5 = arith.constant dense<0.000000e+00> : vector<16xf32>
    %8 = vector.multi_reduction <add>, %7, %cst_5 [1] : vector<16x128xf32> to vector<16xf32>
    %9 = vector.shape_cast %8 : vector<16xf32> to vector<16x1xf32>
    %cst_6 = arith.constant 3.125000e-02 : f32
    %10 = vector.broadcast %cst_6 : f32 to vector<16x1xf32>
    %11 = arith.mulf %9, %10 : vector<16x1xf32>
    %12 = arith.mulf %6, %6 : vector<16x1xf32>
    %13 = arith.subf %11, %12 : vector<16x1xf32>
    %cst_7 = arith.constant 9.99999974E-6 : f32
    %14 = vector.broadcast %cst_7 : f32 to vector<16x1xf32>
    %15 = arith.addf %13, %14 : vector<16x1xf32>
    %16 = math.rsqrt %15 : vector<16x1xf32>
    %c0_8 = arith.constant 0 : index
    %c0_9 = arith.constant 0 : index
    %17 = vector.load %arg3[%c0_8, %c0_9] : memref<1x128xf32, #tpu.memory_space<vmem>>, vector<1x128xf32>
    %c0_10 = arith.constant 0 : index
    %c0_11 = arith.constant 0 : index
    %18 = vector.load %arg4[%c0_10, %c0_11] : memref<1x128xf32, #tpu.memory_space<vmem>>, vector<1x128xf32>
    %19 = vector.broadcast %6 : vector<16x1xf32> to vector<16x128xf32>
    %20 = arith.subf %2, %19 : vector<16x128xf32>
    %21 = vector.broadcast %16 : vector<16x1xf32> to vector<16x128xf32>
    %22 = vector.broadcast %17 : vector<1x128xf32> to vector<16x128xf32>
    %23 = arith.mulf %21, %22 : vector<16x128xf32>
    %24 = arith.mulf %20, %23 : vector<16x128xf32>
    %25 = vector.broadcast %18 : vector<1x128xf32> to vector<16x128xf32>
    %26 = arith.addf %24, %25 : vector<16x128xf32>
    %cst_12 = arith.constant 0.000000e+00 : f32
    %27 = vector.broadcast %cst_12 : f32 to vector<16x128xf32>
    %28 = arith.maximumf %26, %27 : vector<16x128xf32>
    %c0_13 = arith.constant 0 : index
    %c0_14 = arith.constant 0 : index
    %29 = vector.load %arg5[%c0_13, %c0_14] : memref<128x128xf32, #tpu.memory_space<vmem>>, vector<128x128xf32>
    %cst_15 = arith.constant dense<0.000000e+00> : vector<16x128xf32>
    %30 = tpu.matmul %28, %29, %cst_15 {dimension_numbers = #tpu.dot_dimension_numbers<[1], [0], [0], [1], [0, 0, 1, 1], [], []>} : vector<16x128xf32>, vector<128x128xf32>, vector<16x128xf32> -> vector<16x128xf32>
    %c0_16 = arith.constant 0 : index
    %c0_17 = arith.constant 0 : index
    %31 = vector.load %arg6[%c0_16, %c0_17] : memref<16x128xf32, #tpu.memory_space<vmem>>, vector<16x128xf32>
    tpu.vector_store %arg6[%c0_16, %c0_17], %30 {strides = array<i32>} : memref<16x128xf32, #tpu.memory_space<vmem>>, vector<16x128xf32>,
    return
  }
  func.func @transform_0(%arg0: i32) -> (i32, i32) {
    %c0_i32 = arith.constant 0 : i32
    %c0_i32_0 = arith.constant 0 : i32
    return %arg0, %c0_i32 : i32, i32
  }
  func.func @transform_1(%arg0: i32) -> (i32, i32) {
    %c0_i32 = arith.constant 0 : i32
    %c0_i32_0 = arith.constant 0 : i32
    %c0_i32_1 = arith.constant 0 : i32
    return %c0_i32, %c0_i32_0 : i32, i32
  }
  func.func @transform_2(%arg0: i32) -> (i32, i32) {
    %c0_i32 = arith.constant 0 : i32
    %c0_i32_0 = arith.constant 0 : i32
    %c0_i32_1 = arith.constant 0 : i32
    return %c0_i32, %c0_i32_0 : i32, i32
  }
  func.func @transform_3(%arg0: i32) -> (i32, i32) {
    %c0_i32 = arith.constant 0 : i32
    %c0_i32_0 = arith.constant 0 : i32
    %c0_i32_1 = arith.constant 0 : i32
    return %c0_i32, %c0_i32_0 : i32, i32
  }
  func.func @transform_4(%arg0: i32) -> (i32, i32) {
    %c0_i32 = arith.constant 0 : i32
    %c0_i32_0 = arith.constant 0 : i32
    %c0_i32_1 = arith.constant 0 : i32
    return %c0_i32, %c0_i32_0 : i32, i32
  }
  func.func @transform_5(%arg0: i32) -> (i32, i32) {
    %c0_i32 = arith.constant 0 : i32
    %c0_i32_0 = arith.constant 0 : i32
    return %arg0, %c0_i32 : i32, i32
  }
}

</mosaic_0001>

<llo_original>
// kernel: tpu_custom_call.1
$region0: #{tpu_custom_call.1}
  #allocation0 [shape = 'u32[]', space=smem, size = 0x4, offset = 0x4, fixed_abs, tag = 'smem constant byte address 0x4 - core index']
  #allocation1 [shape = 'u32[72,128]{1,0:T(1,128)}', space=vmem, size = 0x9000, scoped, tag = 'internal scratch']
  %s0 = inlined_call_operand.hbm [shape: f32[16,128], index: 0, kind: input, shape index: {}]
  %s1 = inlined_call_operand.hbm [shape: f32[128,128], index: 1, kind: input, shape index: {}]
  %s2 = inlined_call_operand.vmem [shape: f32[1,128], index: 2, kind: input, shape index: {}]
  %s3 = inlined_call_operand.vmem [shape: f32[1,128], index: 3, kind: input, shape index: {}]
  %s4 = inlined_call_operand.hbm [shape: f32[128,128], index: 4, kind: input, shape index: {}]
  %s5 = inlined_call_operand.hbm [shape: f32[16,128], index: 5, kind: output, shape index: {}]
  %s6 = sld [smem:[#allocation0]]
  $region42: #{tpu_custom_call.1} parent=0
    _
  %s8 = ssub.s32 1, %s6
  %s9 = scalar_select 0, %s8, %s6
  $region1: #{tpu_custom_call.1} parent=0
    #allocation2 [shape = 'u8[8192]{0}', space=vmem, size = 0x2000, scoped, tag = 'input window, operand 0, single buffered']
    #allocation3 [shape = 's32[1]{0}', space=sflag, size = 0x4, scoped, tag = 'scoped memory for tpu_custom_call.1']
    #allocation4 [shape = 's32[1]{0}', space=sflag, size = 0x4, scoped, tag = 'scoped memory for tpu_custom_call.1']
    #allocation5 [shape = 'u8[65536]{0}', space=vmem, size = 0x10000, scoped, tag = 'input window, operand 1, single buffered']
    #allocation6 [shape = 's32[1]{0}', space=sflag, size = 0x4, scoped, tag = 'scoped memory for tpu_custom_call.1']
    #allocation7 [shape = 'u8[65536]{0}', space=vmem, size = 0x10000, scoped, tag = 'input window, operand 4, single buffered']
    #allocation8 [shape = 'u8[8192]{0}', space=vmem, size = 0x2000, scoped, tag = 'output window, operand 0, single buffered']
    %10 = vsyncpa [#allocation3], 0
    %11 = vsyncpa [#allocation6], 0
    %12 = vsyncpa [#allocation4], 0
    // Predicated region
    $region2: #{tpu_custom_call.1} parent=1 // pred_check
      _
    $region3: #{tpu_custom_call.1} parent=1 // pred_check_branch
      %14 = sbr.rel (0) target = $region5
    $region4: #{tpu_custom_call.1} parent=1 // pred_region
      %16 = vsyncadd [#allocation3], 0
      %s17 = sshll.u32 %s0, 4
      %s18 = int_to_ptr.hbm [resolvable:$true] %s17
      %s19 = sshll.u32 [#allocation2], 4
      %s20 = int_to_ptr.vmem [resolvable:$true] %s19
      %25 = dma.hbm_to_vmem [thread:$0]  %s18, 256, %s20, [#allocation3], 128, 128, 8
    $region5: #{tpu_custom_call.1} parent=1 // pred_fallthru
      _
    // Predicated region
    $region6: #{tpu_custom_call.1} parent=1 // pred_check
      _
    $region7: #{tpu_custom_call.1} parent=1 // pred_check_branch
      %27 = sbr.rel (0) target = $region9
    $region8: #{tpu_custom_call.1} parent=1 // pred_region
      %29 = vsyncadd [#allocation6], 0
      %s30 = sshll.u32 %s1, 4
      %s31 = int_to_ptr.hbm [resolvable:$true] %s30
      %s32 = sshll.u32 [#allocation5], 4
      %s33 = int_to_ptr.vmem [resolvable:$true] %s32
      %38 = dma.hbm_to_vmem [thread:$0]  %s31, 2048, %s33, [#allocation6], 128, 128, 8
    $region9: #{tpu_custom_call.1} parent=1 // pred_fallthru
      _
    // Predicated region
    $region10: #{tpu_custom_call.1} parent=1 // pred_check
      _
    $region11: #{tpu_custom_call.1} parent=1 // pred_check_branch
      %40 = sbr.rel (0) target = $region13
    $region12: #{tpu_custom_call.1} parent=1 // pred_region
      _
    $region13: #{tpu_custom_call.1} parent=1 // pred_fallthru
      _
    // Predicated region
    $region14: #{tpu_custom_call.1} parent=1 // pred_check
      _
    $region15: #{tpu_custom_call.1} parent=1 // pred_check_branch
      %42 = sbr.rel (0) target = $region17
    $region16: #{tpu_custom_call.1} parent=1 // pred_region
      _
    $region17: #{tpu_custom_call.1} parent=1 // pred_fallthru
      _
    // Predicated region
    $region18: #{tpu_custom_call.1} parent=1 // pred_check
      _
    $region19: #{tpu_custom_call.1} parent=1 // pred_check_branch
      %44 = sbr.rel (0) target = $region21
    $region20: #{tpu_custom_call.1} parent=1 // pred_region
      %46 = vsyncadd [#allocation6], 0
      %s47 = sshll.u32 %s4, 4
      %s48 = int_to_ptr.hbm [resolvable:$true] %s47
      %s49 = sshll.u32 [#allocation7], 4
      %s50 = int_to_ptr.vmem [resolvable:$true] %s49
      %55 = dma.hbm_to_vmem [thread:$0]  %s48, 2048, %s50, [#allocation6], 128, 128, 8
    $region21: #{tpu_custom_call.1} parent=1 // pred_fallthru
      _
    // Predicated region
    $region22: #{tpu_custom_call.1} parent=1 // pred_check
      _
    $region23: #{tpu_custom_call.1} parent=1 // pred_check_branch
      %57 = sbr.rel (0) target = $region25
    $region24: #{tpu_custom_call.1} parent=1 // pred_region
      %59 = dma.done [#allocation3], 256
    $region25: #{tpu_custom_call.1} parent=1 // pred_fallthru
      _
    // Predicated region
    $region26: #{tpu_custom_call.1} parent=1 // pred_check
      _
    $region27: #{tpu_custom_call.1} parent=1 // pred_check_branch
      %61 = sbr.rel (0) target = $region29
    $region28: #{tpu_custom_call.1} parent=1 // pred_region
      %63 = dma.done [#allocation6], 2048
    $region29: #{tpu_custom_call.1} parent=1 // pred_fallthru
      _
    // Predicated region
    $region30: #{tpu_custom_call.1} parent=1 // pred_check
      _
    $region31: #{tpu_custom_call.1} parent=1 // pred_check_branch
      %65 = sbr.rel (0) target = $region33
    $region32: #{tpu_custom_call.1} parent=1 // pred_region
      %67 = dma.done [#allocation6], 2048
    $region33: #{tpu_custom_call.1} parent=1 // pred_fallthru
      _
    %v68 = vld [vmem:[#allocation2] sm:$0xff]
    %v69 = vld [vmem:[#allocation2 + $0x8] sm:$0xff]
    %v70 = vld [vmem:[#allocation5] sm:$0xff]
    %v71 = vld [vmem:[#allocation5 + $0x8] sm:$0xff]
    %v72 = vld [vmem:[#allocation5 + $0x10] sm:$0xff]
    %v73 = vld [vmem:[#allocation5 + $0x18] sm:$0xff]
    %v74 = vld [vmem:[#allocation5 + $0x20] sm:$0xff]
    %v75 = vld [vmem:[#allocation5 + $0x28] sm:$0xff]
    %v76 = vld [vmem:[#allocation5 + $0x30] sm:$0xff]
    %v77 = vld [vmem:[#allocation5 + $0x38] sm:$0xff]
    %v78 = vld [vmem:[#allocation5 + $0x40] sm:$0xff]
    %v79 = vld [vmem:[#allocation5 + $0x48] sm:$0xff]
    %v80 = vld [vmem:[#allocation5 + $0x50] sm:$0xff]
    %v81 = vld [vmem:[#allocation5 + $0x58] sm:$0xff]
    %v82 = vld [vmem:[#allocation5 + $0x60] sm:$0xff]
    %v83 = vld [vmem:[#allocation5 + $0x68] sm:$0xff]
    %v84 = vld [vmem:[#allocation5 + $0x70] sm:$0xff]
    %v85 = vld [vmem:[#allocation5 + $0x78] sm:$0xff]
    %86 = vmatpush.msra.mxu0 %v85
    %87 = vmatpush.msra.mxu0 %v84
    %88 = vmatpush.msra.mxu0 %v83
    %89 = vmatpush.msra.mxu0 %v82
    %90 = vmatpush.msra.mxu0 %v81
    %91 = vmatpush.msra.mxu0 %v80
    %92 = vmatpush.msra.mxu0 %v79
    %93 = vmatpush.msra.mxu0 %v78
    %94 = vmatpush.msra.mxu0 %v77
    %95 = vmatpush.msra.mxu0 %v76
    %96 = vmatpush.msra.mxu0 %v75
    %97 = vmatpush.msra.mxu0 %v74
    %98 = vmatpush.msra.mxu0 %v73
    %99 = vmatpush.msra.mxu0 %v72
    %100 = vmatpush.msra.mxu0 %v71
    %101 = vmatpush.msra.mxu0 %v70
    %102 = vmatmul.f32.gmra.mxu0 %v68
    %v103 = vpop.f32.mrf.mxu0
    %v104 = vadd.f32 0.0, %v103
    %105 = vmatmul.f32.gmra.mxu0 %v69
    %v106 = vpop.f32.mrf.mxu0
    %v107 = vadd.f32 0.0, %v106
    %108 = vdwg.mxu0
    %109 = vadd.xlane.f32.xlu0 %v104
    %v110 = vpop.xlane.xlu0 %109
    %111 = vadd.xlane.f32.xlu0 %v107
    %v112 = vpop.xlane.xlu0 %111
    %v113 = vmul.f32 %v110, 0.03125
    %v114 = vmul.f32 %v112, 0.03125
    %v115 = vmul.f32 %v104, %v104
    %v116 = vmul.f32 %v107, %v107
    %117 = vadd.xlane.f32.xlu0 %v115
    %v118 = vpop.xlane.xlu0 %117
    %119 = vadd.xlane.f32.xlu0 %v116
    %v120 = vpop.xlane.xlu0 %119
    %v121 = vmul.f32 %v118, 0.03125
    %v122 = vmul.f32 %v120, 0.03125
    %v123 = vmul.f32 %v113, %v113
    %v124 = vmul.f32 %v114, %v114
    %v125 = vsub.f32 %v121, %v123
    %v126 = vsub.f32 %v122, %v124
    %v127 = vadd.f32 %v125, 1e-05
    %v128 = vadd.f32 %v126, 1e-05
    %v129 = vrsqrt.pop %v127
    %v130 = vmul.f32 %v129, %v127
    %v131 = vmul.f32 %v130, %v129
    %v132 = vmul.f32 0.5, %v131
    %v133 = vsub.f32 1.5, %v132
    %v134 = vmul.f32 %v129, %v133
    %vm135 = vweird.f32 %v127
    %vm136 = vweird.f32 %v129
    %vm137 = vmor %vm135, %vm136
    %v138 = vsel %vm137, %v129, %v134
    %v139 = vrsqrt.pop %v128
    %v140 = vmul.f32 %v139, %v128
    %v141 = vmul.f32 %v140, %v139
    %v142 = vmul.f32 0.5, %v141
    %v143 = vsub.f32 1.5, %v142
    %v144 = vmul.f32 %v139, %v143
    %vm145 = vweird.f32 %v128
    %vm146 = vweird.f32 %v139
    %vm147 = vmor %vm145, %vm146
    %v148 = vsel %vm147, %v139, %v144
    %v149 = vld [vmem:[%s2] sm:$0x1]
    %v150 = vld [vmem:[%s3] sm:$0x1]
    %v151 = vsub.f32 %v104, %v113
    %v152 = vsub.f32 %v107, %v114
    %v154 = vperm.slane %v149, 0
    %v156 = vmul.f32 %v138, %v154
    %v157 = vmul.f32 %v148, %v154
    %v158 = vmul.f32 %v151, %v156
    %v159 = vmul.f32 %v152, %v157
    %v161 = vperm.slane %v150, 0
    %v163 = vadd.f32 %v158, %v161
    %v164 = vadd.f32 %v159, %v161
    %v165 = vmax.f32 %v163, 0.0
    %v166 = vmax.f32 %v164, 0.0
    %v167 = vld [vmem:[#allocation7] sm:$0xff]
    %v168 = vld [vmem:[#allocation7 + $0x8] sm:$0xff]
    %v169 = vld [vmem:[#allocation7 + $0x10] sm:$0xff]
    %v170 = vld [vmem:[#allocation7 + $0x18] sm:$0xff]
    %v171 = vld [vmem:[#allocation7 + $0x20] sm:$0xff]
    %v172 = vld [vmem:[#allocation7 + $0x28] sm:$0xff]
    %v173 = vld [vmem:[#allocation7 + $0x30] sm:$0xff]
    %v174 = vld [vmem:[#allocation7 + $0x38] sm:$0xff]
    %v175 = vld [vmem:[#allocation7 + $0x40] sm:$0xff]
    %v176 = vld [vmem:[#allocation7 + $0x48] sm:$0xff]
    %v177 = vld [vmem:[#allocation7 + $0x50] sm:$0xff]
    %v178 = vld [vmem:[#allocation7 + $0x58] sm:$0xff]
    %v179 = vld [vmem:[#allocation7 + $0x60] sm:$0xff]
    %v180 = vld [vmem:[#allocation7 + $0x68] sm:$0xff]
    %v181 = vld [vmem:[#allocation7 + $0x70] sm:$0xff]
    %v182 = vld [vmem:[#allocation7 + $0x78] sm:$0xff]
    %183 = vmatpush.msra.mxu0 %v182
    %184 = vmatpush.msra.mxu0 %v181
    %185 = vmatpush.msra.mxu0 %v180
    %186 = vmatpush.msra.mxu0 %v179
    %187 = vmatpush.msra.mxu0 %v178
    %188 = vmatpush.msra.mxu0 %v177
    %189 = vmatpush.msra.mxu0 %v176
    %190 = vmatpush.msra.mxu0 %v175
    %191 = vmatpush.msra.mxu0 %v174
    %192 = vmatpush.msra.mxu0 %v173
    %193 = vmatpush.msra.mxu0 %v172
    %194 = vmatpush.msra.mxu0 %v171
    %195 = vmatpush.msra.mxu0 %v170
    %196 = vmatpush.msra.mxu0 %v169
    %197 = vmatpush.msra.mxu0 %v168
    %198 = vmatpush.msra.mxu0 %v167
    %199 = vmatmul.f32.gmra.mxu0 %v165
    %v200 = vpop.f32.mrf.mxu0
    %v201 = vadd.f32 0.0, %v200
    %202 = vmatmul.f32.gmra.mxu0 %v166
    %v203 = vpop.f32.mrf.mxu0
    %v204 = vadd.f32 0.0, %v203
    %205 = vdwg.mxu0
    %206 = vst [vmem:[#allocation8] sm:$0xff] %v201
    %207 = vst [vmem:[#allocation8 + $0x8] sm:$0xff] %v204
    // Predicated region
    $region34: #{tpu_custom_call.1} parent=1 // pred_check
      _
    $region35: #{tpu_custom_call.1} parent=1 // pred_check_branch
      %209 = sbr.rel (0) target = $region37
    $region36: #{tpu_custom_call.1} parent=1 // pred_region
      %211 = vsyncadd [#allocation4], 0
      %s212 = sshll.u32 [#allocation8], 4
      %s213 = int_to_ptr.vmem [resolvable:$true] %s212
      %s214 = sshll.u32 %s5, 4
      %s215 = int_to_ptr.hbm [resolvable:$true] %s214
      %220 = dma.vmem_to_hbm [thread:$0]  %s213, 256, %s215, [#allocation4], 128, 128, 8
    $region37: #{tpu_custom_call.1} parent=1 // pred_fallthru
      _
    // Predicated region
    $region38: #{tpu_custom_call.1} parent=1 // pred_check
      _
    $region39: #{tpu_custom_call.1} parent=1 // pred_check_branch
      %222 = sbr.rel (0) target = $region41
    $region40: #{tpu_custom_call.1} parent=1 // pred_region
      %224 = dma.done [#allocation4], 256
    $region41: #{tpu_custom_call.1} parent=1 // pred_fallthru
      _
    %225 = vsyncpa [#allocation3], 1
    %226 = vsyncpa [#allocation6], 1
    %227 = vsyncpa [#allocation4], 1

</llo_original>
